<compile_context>
chip_gen: v5e
topology: v5e:2x2
jax: 0.10.0
libtpu: 0.0.40
codegen_flags: <defaults>
</compile_context>

<pallas_src>
import functools

import jax
import jax.numpy as jnp
from jax.experimental import pallas as pl
from jax.experimental.pallas import tpu as pltpu


BLOCK_CFG = (6, 12, 24, 16)
GROWTH = 32
BN_SIZE = 4


# ----------------------------------------------------------------------------
# helpers
# ----------------------------------------------------------------------------
def _round_up(x, m):
    return (x + m - 1) // m * m


def _pick_tile(size, align, cap):
    """Largest multiple of `align` that divides `size` and is <= cap."""
    best = align
    t = align
    limit = min(size, cap)
    while t <= limit:
        if size % t == 0:
            best = t
        t += align
    return best


class KeyGen:
    def __init__(self, key):
        self.key = key

    def next(self):
        self.key, k = jax.random.split(self.key)
        return k


# ----------------------------------------------------------------------------
# Pallas kernels
# ----------------------------------------------------------------------------
def _mm_kernel(prologue, epilogue_relu, *refs):
    """Fused (BN+ReLU) -> matmul -> (BN/bias [+ReLU]) on a (mi, ni, t, ki) grid.

    A is laid out as (T, M, K) "taps" (T=1 for 1x1 convs / linear, T=9 for 3x3
    convs).  The t and k grid axes are reduction axes accumulated into an f32
    VMEM scratch.  Prologue scale/bias act on A's K columns (pre-conv BN),
    epilogue scale/bias act on the output N columns (post-conv BN / bias).
    """
    if prologue:
        a_ref, b_ref, ps_ref, pb_ref, es_ref, eb_ref, o_ref, acc_ref = refs
    else:
        a_ref, b_ref, es_ref, eb_ref, o_ref, acc_ref = refs

    t = pl.program_id(2)
    k = pl.program_id(3)

    @pl.when(jnp.logical_and(t == 0, k == 0))
    def _init():
        acc_ref[...] = jnp.zeros_like(acc_ref)

    a = a_ref[...]                                    # bf16 tile
    if prologue:
        a = jnp.maximum(a.astype(jnp.float32) * ps_ref[...] + pb_ref[...], 0.0)
        a = a.astype(jnp.bfloat16)
    acc_ref[...] += jnp.dot(a, b_ref[...], preferred_element_type=jnp.float32)

    @pl.when(jnp.logical_and(t == pl.num_programs(2) - 1,
                             k == pl.num_programs(3) - 1))
    def _finalize():
        y = acc_ref[...] * es_ref[...] + eb_ref[...]
        if epilogue_relu:
            y = jnp.maximum(y, 0.0)
        o_ref[...] = y.astype(o_ref.dtype)


def _pool_max_kernel(x_ref, o_ref, acc_ref):
    # running max over the window grid axis
    k = pl.program_id(1)

    @pl.when(k == 0)
    def _init():
        acc_ref[...] = jnp.full_like(acc_ref, -jnp.inf)

    acc_ref[...] = jnp.maximum(acc_ref[...], x_ref[...].astype(jnp.float32))

    @pl.when(k == pl.num_programs(1) - 1)
    def _finalize():
        o_ref[...] = acc_ref[...].astype(o_ref.dtype)


def _pool_mean_kernel(relu_prologue, inv_k, x_ref, s_ref, b_ref, o_ref, acc_ref):
    # running mean over the window grid axis, optional fused BN+ReLU prologue
    k = pl.program_id(1)

    @pl.when(k == 0)
    def _init():
        acc_ref[...] = jnp.zeros_like(acc_ref)

    x = x_ref[...].astype(jnp.float32) * s_ref[...] + b_ref[...]
    if relu_prologue:
        x = jnp.maximum(x, 0.0)
    acc_ref[...] += x

    @pl.when(k == pl.num_programs(1) - 1)
    def _finalize():
        o_ref[...] = (acc_ref[...] * inv_k).astype(o_ref.dtype)


# ----------------------------------------------------------------------------
# Pallas wrappers
# ----------------------------------------------------------------------------
def fused_conv_matmul(a_taps, b_taps, pscale=None, pbias=None,
                      escale=None, ebias=None, epilogue_relu=False,
                      out_dtype=jnp.bfloat16, tm_max=256, tn_max=256, tk_max=512):
    """a_taps:(T,M,K), b_taps:(T,K,N) -> (M,N). BN/bias fused as prologue/epilogue."""
    T, M, K = a_taps.shape
    Tb, Kb, N = b_taps.shape
    assert T == Tb and K == Kb
    prologue = pscale is not None

    Mp = _round_up(M, 16)
    Np = _round_up(N, 128)
    Kp = _round_up(K, 128)
    tm = _pick_tile(Mp, 16, tm_max)
    tn = _pick_tile(Np, 128, tn_max)
    tk = _pick_tile(Kp, 128, tk_max)

    a_p = jnp.pad(a_taps.astype(jnp.bfloat16), ((0, 0), (0, Mp - M), (0, Kp - K)))
    b_p = jnp.pad(b_taps.astype(jnp.bfloat16), ((0, 0), (0, Kp - K), (0, Np - N)))

    if escale is None:
        escale = jnp.ones((N,), jnp.float32)
    if ebias is None:
        ebias = jnp.zeros((N,), jnp.float32)
    es_p = jnp.pad(escale.astype(jnp.float32), (0, Np - N)).reshape(1, Np)
    eb_p = jnp.pad(ebias.astype(jnp.float32), (0, Np - N)).reshape(1, Np)

    operands = [a_p, b_p]
    in_specs = [
        pl.BlockSpec((None, tm, tk), lambda mi, ni, t, ki: (t, mi, ki)),
        pl.BlockSpec((None, tk, tn), lambda mi, ni, t, ki: (t, ki, ni)),
    ]
    if prologue:
        ps_p = jnp.pad(pscale.astype(jnp.float32), (0, Kp - K)).reshape(1, Kp)
        pb_p = jnp.pad(pbias.astype(jnp.float32), (0, Kp - K)).reshape(1, Kp)
        operands += [ps_p, pb_p]
        in_specs += [
            pl.BlockSpec((1, tk), lambda mi, ni, t, ki: (0, ki)),
            pl.BlockSpec((1, tk), lambda mi, ni, t, ki: (0, ki)),
        ]
    operands += [es_p, eb_p]
    in_specs += [
        pl.BlockSpec((1, tn), lambda mi, ni, t, ki: (0, ni)),
        pl.BlockSpec((1, tn), lambda mi, ni, t, ki: (0, ni)),
    ]

    grid = (Mp // tm, Np // tn, T, Kp // tk)
    out_bytes = Mp * Np * jnp.dtype(out_dtype).itemsize
    cost = pl.CostEstimate(
        flops=2 * T * Mp * Kp * Np,
        transcendentals=0,
        bytes_accessed=2 * (a_p.size + b_p.size) + out_bytes,
    )

    out = pl.pallas_call(
        functools.partial(_mm_kernel, prologue, epilogue_relu),
        out_shape=jax.ShapeDtypeStruct((Mp, Np), out_dtype),
        grid=grid,
        in_specs=in_specs,
        out_specs=pl.BlockSpec((tm, tn), lambda mi, ni, t, ki: (mi, ni)),
        scratch_shapes=[pltpu.VMEM((tm, tn), jnp.float32)],
        compiler_params=pltpu.CompilerParams(
            dimension_semantics=("parallel", "parallel", "arbitrary", "arbitrary")),
        cost_estimate=cost,
    )(*operands)
    return out[:M, :N]


def pallas_window_pool(stacked, op, scale=None, bias=None, relu_prologue=False,
                       out_dtype=jnp.bfloat16, tm_max=256):
    """stacked:(K,M,C) -> (M,C) running max/mean over K (grid reduction axis)."""
    K, M, C = stacked.shape
    Mp = _round_up(M, 16)
    Cp = _round_up(C, 128)
    tm = _pick_tile(Mp, 16, tm_max)
    x_p = jnp.pad(stacked, ((0, 0), (0, Mp - M), (0, Cp - C)))

    grid = (Mp // tm, K)
    x_spec = pl.BlockSpec((None, tm, Cp), lambda mi, k: (k, mi, 0))
    out_spec = pl.BlockSpec((tm, Cp), lambda mi, k: (mi, 0))
    cparams = pltpu.CompilerParams(dimension_semantics=("parallel", "arbitrary"))

    if op == "max":
        out = pl.pallas_call(
            _pool_max_kernel,
            out_shape=jax.ShapeDtypeStruct((Mp, Cp), out_dtype),
            grid=grid,
            in_specs=[x_spec],
            out_specs=out_spec,
            scratch_shapes=[pltpu.VMEM((tm, Cp), jnp.float32)],
            compiler_params=cparams,
        )(x_p)
    else:
        if scale is None:
            scale = jnp.ones((C,), jnp.float32)
        if bias is None:
            bias = jnp.zeros((C,), jnp.float32)
        s_p = jnp.pad(scale.astype(jnp.float32), (0, Cp - C)).reshape(1, Cp)
        b_p = jnp.pad(bias.astype(jnp.float32), (0, Cp - C)).reshape(1, Cp)
        out = pl.pallas_call(
            functools.partial(_pool_mean_kernel, relu_prologue, 1.0 / K),
            out_shape=jax.ShapeDtypeStruct((Mp, Cp), out_dtype),
            grid=grid,
            in_specs=[x_spec,
                      pl.BlockSpec((1, Cp), lambda mi, k: (0, 0)),
                      pl.BlockSpec((1, Cp), lambda mi, k: (0, 0))],
            out_specs=out_spec,
            scratch_shapes=[pltpu.VMEM((tm, Cp), jnp.float32)],
            compiler_params=cparams,
        )(x_p, s_p, b_p)
    return out[:M, :C]


# ----------------------------------------------------------------------------
# network glue (reshapes / patch extraction only; all compute is in Pallas)
# ----------------------------------------------------------------------------
def _im2col(x, kh, kw, stride, padding):
    N, H, W, C = x.shape
    xp = jnp.pad(x, ((0, 0), (padding, padding), (padding, padding), (0, 0)))
    oh = (H + 2 * padding - kh) // stride + 1
    ow = (W + 2 * padding - kw) // stride + 1
    cols = [xp[:, i:i + stride * oh:stride, j:j + stride * ow:stride, :]
            for i in range(kh) for j in range(kw)]
    cols = jnp.concatenate(cols, axis=-1).reshape(N * oh * ow, kh * kw * C)
    return cols, oh, ow


def _shift_taps_3x3(y):
    """(N,H,W,C) -> (9, N*H*W, C): shifted slabs of the zero-padded input."""
    N, H, W, C = y.shape
    yp = jnp.pad(y, ((0, 0), (1, 1), (1, 1), (0, 0)))
    taps = [yp[:, i:i + H, j:j + W, :].reshape(N * H * W, C)
            for i in range(3) for j in range(3)]
    return jnp.stack(taps, axis=0)


def maxpool_3x3_s2_p1(x):
    N, H, W, C = x.shape
    xp = jnp.pad(x, ((0, 0), (1, 1), (1, 1), (0, 0)), constant_values=-jnp.inf)
    oh = (H + 2 - 3) // 2 + 1
    ow = (W + 2 - 3) // 2 + 1
    wins = jnp.stack([xp[:, i:i + 2 * oh:2, j:j + 2 * ow:2, :].reshape(N * oh * ow, C)
                      for i in range(3) for j in range(3)], axis=0)
    out = pallas_window_pool(wins, "max")
    return out.reshape(N, oh, ow, C)


def avgpool_2x2_s2(x):
    N, H, W, C = x.shape
    oh, ow = H // 2, W // 2
    wins = jnp.stack([x[:, i::2, j::2, :].reshape(N * oh * ow, C)
                      for i in range(2) for j in range(2)], axis=0)
    out = pallas_window_pool(wins, "mean")
    return out.reshape(N, oh, ow, C)


# ----------------------------------------------------------------------------
# parameters (BN folded, weights pre-reshaped to (taps, K, O) bf16)
# ----------------------------------------------------------------------------
def _make_conv(kg, out_c, in_c, kh, kw):
    fan_in = in_c * kh * kw
    std = (2.0 / fan_in) ** 0.5
    return std * jax.random.normal(kg.next(), (out_c, in_c, kh, kw), jnp.float32)


def _make_bn(kg, c):
    gamma = 1.0 + 0.1 * jax.random.normal(kg.next(), (c,), jnp.float32)
    beta = 0.1 * jax.random.normal(kg.next(), (c,), jnp.float32)
    mean = 0.1 * jax.random.normal(kg.next(), (c,), jnp.float32)
    var = jnp.abs(1.0 + 0.1 * jax.random.normal(kg.next(), (c,), jnp.float32))
    return (gamma, beta, mean, var)


def _fold_bn(bn, eps=1e-5):
    gamma, beta, mean, var = bn
    scale = gamma / jnp.sqrt(var + eps)
    bias = beta - mean * scale
    return scale.astype(jnp.float32), bias.astype(jnp.float32)


def _conv_to_taps(w):
    O, C, kh, kw = w.shape
    return jnp.transpose(w, (2, 3, 1, 0)).reshape(kh * kw, C, O).astype(jnp.bfloat16)


def init_densenet121_params(key):
    # TODO(synk): torchvision pretrained ImageNet weights cannot be loaded here;
    # parameters are initialized deterministically instead.
    kg = KeyGen(key)
    p = {}

    conv0 = _make_conv(kg, 64, 3, 7, 7)
    p["w0"] = jnp.transpose(conv0, (2, 3, 1, 0)).reshape(1, 7 * 7 * 3, 64).astype(jnp.bfloat16)
    p["s0"], p["b0"] = _fold_bn(_make_bn(kg, 64))

    nf = 64
    for bi, nl in enumerate(BLOCK_CFG):
        layers = []
        for li in range(nl):
            cin = nf + li * GROWTH
            s1, b1 = _fold_bn(_make_bn(kg, cin))
            w1 = _make_conv(kg, BN_SIZE * GROWTH, cin, 1, 1)
            s2, b2 = _fold_bn(_make_bn(kg, BN_SIZE * GROWTH))
            w2 = _make_conv(kg, GROWTH, BN_SIZE * GROWTH, 3, 3)
            layers.append({
                "ps1": s1, "pb1": b1, "w1": _conv_to_taps(w1),
                "es2": s2, "eb2": b2, "w2": _conv_to_taps(w2),
            })
        p[f"block{bi + 1}"] = layers
        nf = nf + nl * GROWTH
        if bi < len(BLOCK_CFG) - 1:
            s, b = _fold_bn(_make_bn(kg, nf))
            wt = _make_conv(kg, nf // 2, nf, 1, 1)
            p[f"trans{bi + 1}"] = {"ps": s, "pb": b, "w": _conv_to_taps(wt)}
            nf = nf // 2

    p["s5"], p["b5"] = _fold_bn(_make_bn(kg, nf))          # nf == 1024
    cls_w = 0.05 * jax.random.normal(kg.next(), (10, nf), jnp.float32)
    cls_b = 0.05 * jax.random.normal(kg.next(), (10,), jnp.float32)
    p["cls_w"] = cls_w.T[None].astype(jnp.bfloat16)        # (1, 1024, 10), pre-transposed
    p["cls_b"] = cls_b
    return p


# ----------------------------------------------------------------------------
# forward pass (music_net.forward == densenet121 with 10-class classifier)
# ----------------------------------------------------------------------------
def dense_layer(cat, lp):
    N, H, W, Cin = cat.shape
    M = N * H * W
    # norm1+relu (prologue) -> conv1 1x1 -> norm2+relu (epilogue): one kernel
    y = fused_conv_matmul(cat.reshape(1, M, Cin), lp["w1"],
                          pscale=lp["ps1"], pbias=lp["pb1"],
                          escale=lp["es2"], ebias=lp["eb2"], epilogue_relu=True)
    y = y.reshape(N, H, W, lp["w1"].shape[-1])
    # 3x3 conv as a 9-tap reduction grid axis (no im2col concat)
    taps = _shift_taps_3x3(y)
    out = fused_conv_matmul(taps, lp["w2"])
    return out.reshape(N, H, W, lp["w2"].shape[-1])


def transition(x, tp):
    N, H, W, C = x.shape
    # transition norm+relu fused as prologue of the 1x1 conv
    y = fused_conv_matmul(x.reshape(1, N * H * W, C), tp["w"],
                          pscale=tp["ps"], pbias=tp["pb"])
    y = y.reshape(N, H, W, tp["w"].shape[-1])
    return avgpool_2x2_s2(y)


def music_net_forward(params, x_nchw):
    x = jnp.transpose(x_nchw, (0, 2, 3, 1)).astype(jnp.bfloat16)   # NHWC, bf16

    # stem: conv0 7x7/s2 with norm0+relu fused as the matmul epilogue, then maxpool
    N = x.shape[0]
    cols, oh, ow = _im2col(x, 7, 7, 2, 3)
    y = fused_conv_matmul(cols[None], params["w0"],
                          escale=params["s0"], ebias=params["b0"],
                          epilogue_relu=True)
    x = y.reshape(N, oh, ow, 64)
    x = maxpool_3x3_s2_p1(x)

    # TODO(synk): dense-block concatenation is still jnp.concatenate in XLA; an
    # aliased preallocated channel buffer (input_output_aliases) would remove
    # the quadratic copies.
    for bi, nl in enumerate(BLOCK_CFG):
        feats = [x]
        for li in range(nl):
            cat = feats[0] if len(feats) == 1 else jnp.concatenate(feats, axis=-1)
            feats.append(dense_layer(cat, params[f"block{bi + 1}"][li]))
        x = jnp.concatenate(feats, axis=-1)
        if bi < len(BLOCK_CFG) - 1:
            x = transition(x, params[f"trans{bi + 1}"])

    # head: norm5+relu fused into the global-average-pool prologue, then classifier
    Nb, H, W, C = x.shape
    stacked = jnp.transpose(x.reshape(Nb, H * W, C), (1, 0, 2))    # (H*W, N, C)
    feat = pallas_window_pool(stacked, "mean", scale=params["s5"],
                              bias=params["b5"], relu_prologue=True)  # (N, 1024)
    logits = fused_conv_matmul(feat[None], params["cls_w"],
                               ebias=params["cls_b"], out_dtype=jnp.float32)
    return logits


# ----------------------------------------------------------------------------
if __name__ == "__main__":
    root = jax.random.PRNGKey(0)
    k_params, k_input = jax.random.split(root)

    params = init_densenet121_params(k_params)

    # small input consistent with densenet121: NCHW, 3 channels, 32x32 spatial
    x = jax.random.normal(k_input, (2, 3, 32, 32), jnp.float32)

    logits = music_net_forward(params, x)
    logits = jax.block_until_ready(logits)

    assert logits.shape == (2, 10), logits.shape
    assert bool(jnp.isfinite(logits).all())
    print("KERNEL_OK")
</pallas_src>

<mosaic_0001>
module attributes {stable_mosaic.version = 11 : i64} {
  func.func @_mm_kernel(%arg0: i32, %arg1: i32, %arg2: i32, %arg3: i32, %arg4: memref<1x256x256xbf16, #tpu.memory_space<vmem>>, %arg5: memref<1x256x128xbf16, #tpu.memory_space<vmem>>, %arg6: memref<1x128xf32, #tpu.memory_space<vmem>>, %arg7: memref<1x128xf32, #tpu.memory_space<vmem>>, %arg8: memref<256x128xbf16, #tpu.memory_space<vmem>>, %arg9: memref<256x128xf32, #tpu.memory_space<vmem>>) attributes {dimension_semantics = [#tpu.dimension_semantics<parallel>, #tpu.dimension_semantics<parallel>, #tpu.dimension_semantics<arbitrary>, #tpu.dimension_semantics<arbitrary>], iteration_bounds = array<i64: 2, 1, 1, 1>, scalar_prefetch = 0 : i64, scratch_operands = 1 : i64, tpu.core_type = #tpu.core_type<tc>, window_params = [{transform_indices = @transform_0, window_bounds = array<i64: 1, 256, 256>}, {transform_indices = @transform_1, window_bounds = array<i64: 1, 256, 128>}, {transform_indices = @transform_2, window_bounds = array<i64: 1, 128>}, {transform_indices = @transform_3, window_bounds = array<i64: 1, 128>}, {transform_indices = @transform_4, window_bounds = array<i64: 256, 128>}]} {
    %c0_i32 = arith.constant 0 : i32
    %0 = arith.cmpi eq, %arg2, %c0_i32 : i32
    %c0_i32_0 = arith.constant 0 : i32
    %1 = arith.cmpi eq, %arg3, %c0_i32_0 : i32
    %2 = arith.andi %0, %1 : i1
    %3 = arith.extui %2 : i1 to i32
    %c0_i32_1 = arith.constant 0 : i32
    %4 = arith.cmpi ne, %3, %c0_i32_1 : i32
    scf.if %4 {
      %cst_14 = arith.constant 0.000000e+00 : f32
      %18 = vector.broadcast %cst_14 : f32 to vector<256x128xf32>
      %c0_15 = arith.constant 0 : index
      %c0_16 = arith.constant 0 : index
      %19 = vector.load %arg9[%c0_15, %c0_16] : memref<256x128xf32, #tpu.memory_space<vmem>>, vector<256x128xf32>
      tpu.vector_store %arg9[%c0_15, %c0_16], %18 {strides = array<i32>} : memref<256x128xf32, #tpu.memory_space<vmem>>, vector<256x128xf32>,
    } else {
    }
    %c0 = arith.constant 0 : index
    %c0_2 = arith.constant 0 : index
    %c0_3 = arith.constant 0 : index
    %5 = vector.load %arg4[%c0, %c0_2, %c0_3] : memref<1x256x256xbf16, #tpu.memory_space<vmem>>, vector<1x256x256xbf16>
    %6 = vector.shape_cast %5 : vector<1x256x256xbf16> to vector<256x256xbf16>
    %c0_4 = arith.constant 0 : index
    %c0_5 = arith.constant 0 : index
    %7 = vector.load %arg9[%c0_4, %c0_5] : memref<256x128xf32, #tpu.memory_space<vmem>>, vector<256x128xf32>
    %c0_6 = arith.constant 0 : index
    %c0_7 = arith.constant 0 : index
    %c0_8 = arith.constant 0 : index
    %8 = vector.load %arg5[%c0_6, %c0_7, %c0_8] : memref<1x256x128xbf16, #tpu.memory_space<vmem>>, vector<1x256x128xbf16>
    %9 = vector.shape_cast %8 : vector<1x256x128xbf16> to vector<256x128xbf16>
    %cst = arith.constant dense<0.000000e+00> : vector<256x128xf32>
    %10 = tpu.matmul %6, %9, %cst {dimension_numbers = #tpu.dot_dimension_numbers<[1], [0], [0], [1], [0, 0, 1, 1], [], []>} : vector<256x256xbf16>, vector<256x128xbf16>, vector<256x128xf32> -> vector<256x128xf32>
    %11 = arith.addf %7, %10 : vector<256x128xf32>
    %c0_9 = arith.constant 0 : index
    %c0_10 = arith.constant 0 : index
    %12 = vector.load %arg9[%c0_9, %c0_10] : memref<256x128xf32, #tpu.memory_space<vmem>>, vector<256x128xf32>
    tpu.vector_store %arg9[%c0_9, %c0_10], %11 {strides = array<i32>} : memref<256x128xf32, #tpu.memory_space<vmem>>, vector<256x128xf32>,
    %c0_i32_11 = arith.constant 0 : i32
    %13 = arith.cmpi eq, %arg2, %c0_i32_11 : i32
    %c0_i32_12 = arith.constant 0 : i32
    %14 = arith.cmpi eq, %arg3, %c0_i32_12 : i32
    %15 = arith.andi %13, %14 : i1
    %16 = arith.extui %15 : i1 to i32
    %c0_i32_13 = arith.constant 0 : i32
    %17 = arith.cmpi ne, %16, %c0_i32_13 : i32
    scf.if %17 {
      %c0_14 = arith.constant 0 : index
      %c0_15 = arith.constant 0 : index
      %18 = vector.load %arg9[%c0_14, %c0_15] : memref<256x128xf32, #tpu.memory_space<vmem>>, vector<256x128xf32>
      %c0_16 = arith.constant 0 : index
      %c0_17 = arith.constant 0 : index
      %19 = vector.load %arg6[%c0_16, %c0_17] : memref<1x128xf32, #tpu.memory_space<vmem>>, vector<1x128xf32>
      %20 = vector.broadcast %19 : vector<1x128xf32> to vector<256x128xf32>
      %21 = arith.mulf %18, %20 : vector<256x128xf32>
      %c0_18 = arith.constant 0 : index
      %c0_19 = arith.constant 0 : index
      %22 = vector.load %arg7[%c0_18, %c0_19] : memref<1x128xf32, #tpu.memory_space<vmem>>, vector<1x128xf32>
      %23 = vector.broadcast %22 : vector<1x128xf32> to vector<256x128xf32>
      %24 = arith.addf %21, %23 : vector<256x128xf32>
      %cst_20 = arith.constant 0.000000e+00 : f32
      %25 = vector.broadcast %cst_20 : f32 to vector<256x128xf32>
      %26 = arith.maximumf %24, %25 : vector<256x128xf32>
      %27 = arith.truncf %26 : vector<256x128xf32> to vector<256x128xbf16>
      %c0_21 = arith.constant 0 : index
      %c0_22 = arith.constant 0 : index
      %28 = vector.load %arg8[%c0_21, %c0_22] : memref<256x128xbf16, #tpu.memory_space<vmem>>, vector<256x128xbf16>
      tpu.vector_store %arg8[%c0_21, %c0_22], %27 {strides = array<i32>} : memref<256x128xbf16, #tpu.memory_space<vmem>>, vector<256x128xbf16>,
    } else {
    }
    return
  }
  func.func @transform_0(%arg0: i32, %arg1: i32, %arg2: i32, %arg3: i32) -> (i32, i32, i32) {
    %c0_i32 = arith.constant 0 : i32
    return %arg2, %arg0, %arg3 : i32, i32, i32
  }
  func.func @transform_1(%arg0: i32, %arg1: i32, %arg2: i32, %arg3: i32) -> (i32, i32, i32) {
    %c0_i32 = arith.constant 0 : i32
    return %arg2, %arg3, %arg1 : i32, i32, i32
  }
  func.func @transform_2(%arg0: i32, %arg1: i32, %arg2: i32, %arg3: i32) -> (i32, i32) {
    %c0_i32 = arith.constant 0 : i32
    %c0_i32_0 = arith.constant 0 : i32
    return %c0_i32, %arg1 : i32, i32
  }
  func.func @transform_3(%arg0: i32, %arg1: i32, %arg2: i32, %arg3: i32) -> (i32, i32) {
    %c0_i32 = arith.constant 0 : i32
    %c0_i32_0 = arith.constant 0 : i32
    return %c0_i32, %arg1 : i32, i32
  }
  func.func @transform_4(%arg0: i32, %arg1: i32, %arg2: i32, %arg3: i32) -> (i32, i32) {
    %c0_i32 = arith.constant 0 : i32
    return %arg0, %arg1 : i32, i32
  }
}

</mosaic_0001>

<llo_original>
// kernel: tpu_custom_call.1
$region0: #{tpu_custom_call.1}
  #allocation0 [shape = 'u32[]', space=smem, size = 0x4, offset = 0x4, fixed_abs, tag = 'smem constant byte address 0x4 - core index']
  #allocation1 [shape = 'u32[72,128]{1,0:T(1,128)}', space=vmem, size = 0x9000, scoped, tag = 'internal scratch']
  #allocation2 [shape = 'f32[256,128]{1,0:T(8,128)}', space=vmem, size = 0x20000, scoped, tag = 'scratch operand']
  %s0 = inlined_call_operand.hbm [shape: bf16[1,512,256], index: 0, kind: input, shape index: {}]
  %s1 = inlined_call_operand.hbm [shape: bf16[1,256,128], index: 1, kind: input, shape index: {}]
  %s2 = inlined_call_operand.vmem [shape: f32[1,128], index: 2, kind: input, shape index: {}]
  %s3 = inlined_call_operand.vmem [shape: f32[1,128], index: 3, kind: input, shape index: {}]
  %s4 = inlined_call_operand.hbm [shape: bf16[512,128], index: 4, kind: output, shape index: {}]
  %s5 = sld [smem:[#allocation0]]
  $region65: #{tpu_custom_call.1} parent=0
    _
  %s7 = ssub.s32 1, %s5
  %s8 = scalar_select 0, %s7, %s5
  $region1: #{tpu_custom_call.1} parent=0
    #allocation3 [shape = 'u8[262144]{0}', space=vmem, size = 0x40000, scoped, tag = 'input window, operand 0']
    #allocation4 [shape = 's32[2]{0}', space=sflag, size = 0x8, scoped, tag = 'scoped memory for tpu_custom_call.1']
    #allocation5 [shape = 's32[2]{0}', space=sflag, size = 0x8, scoped, tag = 'scoped memory for tpu_custom_call.1']
    #allocation6 [shape = 'u8[65536]{0}', space=vmem, size = 0x10000, scoped, tag = 'input window, operand 1, single buffered']
    #allocation7 [shape = 's32[1]{0}', space=sflag, size = 0x4, scoped, tag = 'scoped memory for tpu_custom_call.1']
    #allocation8 [shape = 'u8[131072]{0}', space=vmem, size = 0x20000, scoped, tag = 'output window, operand 0']
    %9 = vsyncpa [#allocation4], 0
    %s10 = scalar_lea.sflag [#allocation4], 1
    %11 = vsyncpa %s10, 0
    %12 = vsyncpa [#allocation7], 0
    %13 = vsyncpa [#allocation5], 0
    %s14 = scalar_lea.sflag [#allocation5], 1
    %15 = vsyncpa %s14, 0
    loop: start=0, step=1, limit=4
    $region2: #{tpu_custom_call.1} parent=1 // loop_pre_header
      _
    $region3: #{tpu_custom_call.1} parent=1 // loop_header
      %s17 = sphi 0, %s21
      %p18 = scmp.ge.s32.totalorder %s17, 4
      %s24 = sphi 0, %s50
      %s25 = sphi 0, %s46
      %s26 = sphi 0, %s42
      %s27 = sphi 0, %s38
      %s28 = sphi 0, %s24
      %s29 = sphi 0, %s25
      %s30 = sphi 0, %s26
      %s31 = sphi 0, %s27
      %s32 = sphi 0, %s28
      %s33 = sphi 0, %s29
      %s34 = sphi 0, %s30
      %s35 = sphi 0, %s31
      %s57 = sphi 0, %s59
      %s60 = sphi 0, %s57
      %s61 = sphi 0, %s60
      %s77 = sphi 0, %s61
      %s87 = sphi 0, %s89
      %s90 = sphi 0, %s87
      %s91 = sphi 0, %s90
      %s107 = sphi 0, %s91
      %s113 = sphi 0, %s115
      %s116 = sphi 0, %s113
      %s117 = sphi 0, %s116
      %s133 = sphi 0, %s117
      %s139 = sphi 0, %s141
      %s142 = sphi 0, %s139
      %s143 = sphi 0, %s142
      %s159 = sphi 0, %s143
      %s167 = sphi 0, %s169
      %s170 = sphi 0, %s167
      %s171 = sphi 0, %s170
      %s187 = sphi 0, %s171
    $region4: #{tpu_custom_call.1} parent=1 // loop_header_branch
      %20 = sbr.rel (%p18) target = $region8
    $region5: #{tpu_custom_call.1} parent=1 // loop_body
      %s22 = ssub.s32 %s17, 1
      %s23 = ssub.s32 %s17, 2
      %s36 = sadd.s32 1, %s27
      %p37 = scmp.ge.s32.totalorder %s36, 1
      %s38 = scalar_select %p37, 0, %s36
      %s39 = sadd.s32 1, %s26
      %s40 = scalar_select %p37, %s39, %s26
      %p41 = scmp.ge.s32.totalorder %s40, 1
      %s42 = scalar_select %p41, 0, %s40
      %s43 = sadd.s32 1, %s25
      %s44 = scalar_select %p41, %s43, %s25
      %p45 = scmp.ge.s32.totalorder %s44, 1
      %s46 = scalar_select %p45, 0, %s44
      %s47 = sadd.s32 1, %s24
      %s48 = scalar_select %p45, %s47, %s24
      %p49 = scmp.ge.s32.totalorder %s48, 2
      %s50 = scalar_select %p49, 0, %s48
      %s51 = ssub.s32 %s26, %s42
      %s52 = ssub.s32 %s24, %s50
      %s53 = sor.u32 %s51, %s52
      %s54 = ssub.s32 %s27, %s38
      %s55 = sor.u32 %s53, %s54
      %p56 = scmp.eq.s32.totalorder %s55, 0
      %s58 = sadd.s32 %s57, 1
      %s59 = scalar_select %p56, %s57, %s58
      %p62 = pneg %p56
      %p63 = scmp.eq.s32.totalorder %s17, 1
      %p64 = por %p62, %p63
      %p65 = scmp.ne.s32.totalorder %s57, %s60
      %p66 = scmp.eq.s32.totalorder %s17, 0
      %p67 = por %p65, %p66
      %p68 = scmp.ne.s32.totalorder %s57, %s60
      %p69 = scmp.eq.s32.totalorder %s22, 1
      %p70 = por %p68, %p69
      %p71 = scmp.ne.s32.totalorder %s60, %s61
      %p72 = scmp.eq.s32.totalorder %s22, 0
      %p73 = por %p71, %p72
      %p74 = scmp.ne.s32.totalorder %s60, %s61
      %p75 = scmp.eq.s32.totalorder %s23, 1
      %p76 = por %p74, %p75
      %p78 = scmp.ne.s32.totalorder %s61, %s77
      %p79 = scmp.eq.s32.totalorder %s23, 0
      %p80 = por %p78, %p79
      %s81 = ssub.s32 %s26, %s42
      %s82 = ssub.s32 %s27, %s38
      %s83 = sor.u32 %s81, %s82
      %s84 = ssub.s32 %s25, %s46
      %s85 = sor.u32 %s83, %s84
      %p86 = scmp.eq.s32.totalorder %s85, 0
      %s88 = sadd.s32 %s87, 1
      %s89 = scalar_select %p86, %s87, %s88
      %p92 = pneg %p86
      %p93 = scmp.eq.s32.totalorder %s17, 1
      %p94 = por %p92, %p93
      %p95 = scmp.ne.s32.totalorder %s87, %s90
      %p96 = scmp.eq.s32.totalorder %s17, 0
      %p97 = por %p95, %p96
      %p98 = scmp.ne.s32.totalorder %s87, %s90
      %p99 = scmp.eq.s32.totalorder %s22, 1
      %p100 = por %p98, %p99
      %p101 = scmp.ne.s32.totalorder %s90, %s91
      %p102 = scmp.eq.s32.totalorder %s22, 0
      %p103 = por %p101, %p102
      %p104 = scmp.ne.s32.totalorder %s90, %s91
      %p105 = scmp.eq.s32.totalorder %s23, 1
      %p106 = por %p104, %p105
      %p108 = scmp.ne.s32.totalorder %s91, %s107
      %p109 = scmp.eq.s32.totalorder %s23, 0
      %p110 = por %p108, %p109
      %s111 = ssub.s32 %s25, %s46
      %p112 = scmp.eq.s32.totalorder %s111, 0
      %s114 = sadd.s32 %s113, 1
      %s115 = scalar_select %p112, %s113, %s114
      %p118 = pneg %p112
      %p119 = scmp.eq.s32.totalorder %s17, 1
      %p120 = por %p118, %p119
      %p121 = scmp.ne.s32.totalorder %s113, %s116
      %p122 = scmp.eq.s32.totalorder %s17, 0
      %p123 = por %p121, %p122
      %p124 = scmp.ne.s32.totalorder %s113, %s116
      %p125 = scmp.eq.s32.totalorder %s22, 1
      %p126 = por %p124, %p125
      %p127 = scmp.ne.s32.totalorder %s116, %s117
      %p128 = scmp.eq.s32.totalorder %s22, 0
      %p129 = por %p127, %p128
      %p130 = scmp.ne.s32.totalorder %s116, %s117
      %p131 = scmp.eq.s32.totalorder %s23, 1
      %p132 = por %p130, %p131
      %p134 = scmp.ne.s32.totalorder %s117, %s133
      %p135 = scmp.eq.s32.totalorder %s23, 0
      %p136 = por %p134, %p135
      %s137 = ssub.s32 %s25, %s46
      %p138 = scmp.eq.s32.totalorder %s137, 0
      %s140 = sadd.s32 %s139, 1
      %s141 = scalar_select %p138, %s139, %s140
      %p144 = pneg %p138
      %p145 = scmp.eq.s32.totalorder %s17, 1
      %p146 = por %p144, %p145
      %p147 = scmp.ne.s32.totalorder %s139, %s142
      %p148 = scmp.eq.s32.totalorder %s17, 0
      %p149 = por %p147, %p148
      %p150 = scmp.ne.s32.totalorder %s139, %s142
      %p151 = scmp.eq.s32.totalorder %s22, 1
      %p152 = por %p150, %p151
      %p153 = scmp.ne.s32.totalorder %s142, %s143
      %p154 = scmp.eq.s32.totalorder %s22, 0
      %p155 = por %p153, %p154
      %p156 = scmp.ne.s32.totalorder %s142, %s143
      %p157 = scmp.eq.s32.totalorder %s23, 1
      %p158 = por %p156, %p157
      %p160 = scmp.ne.s32.totalorder %s143, %s159
      %p161 = scmp.eq.s32.totalorder %s23, 0
      %p162 = por %p160, %p161
      %s163 = ssub.s32 %s24, %s50
      %s164 = ssub.s32 %s25, %s46
      %s165 = sor.u32 %s163, %s164
      %p166 = scmp.eq.s32.totalorder %s165, 0
      %s168 = sadd.s32 %s167, 1
      %s169 = scalar_select %p166, %s167, %s168
      %p172 = pneg %p166
      %p173 = scmp.eq.s32.totalorder %s17, 1
      %p174 = por %p172, %p173
      %p175 = scmp.ne.s32.totalorder %s167, %s170
      %p176 = scmp.eq.s32.totalorder %s17, 0
      %p177 = por %p175, %p176
      %p178 = scmp.ne.s32.totalorder %s167, %s170
      %p179 = scmp.eq.s32.totalorder %s22, 1
      %p180 = por %p178, %p179
      %p181 = scmp.ne.s32.totalorder %s170, %s171
      %p182 = scmp.eq.s32.totalorder %s22, 0
      %p183 = por %p181, %p182
      %p184 = scmp.ne.s32.totalorder %s170, %s171
      %p185 = scmp.eq.s32.totalorder %s23, 1
      %p186 = por %p184, %p185
      %p188 = scmp.ne.s32.totalorder %s171, %s187
      %p189 = scmp.eq.s32.totalorder %s23, 0
      %p190 = por %p188, %p189
      %p191 = scmp.le.s32.totalorder 1, %s17
      %p192 = scmp.lt.s32.totalorder %s17, 3
      %p193 = pnand %p191, %p192
      %p194 = pneg %p193
      // Predicated region
      $region9: #{tpu_custom_call.1} parent=5 // pred_check
        _
      $region10: #{tpu_custom_call.1} parent=5 // pred_check_branch
        %196 = sbr.rel (%p193) target = $region12
      $region11: #{tpu_custom_call.1} parent=5 // pred_region
        %s197 = ssub.s32 %s17, 1
        // Predicated region
        $region13: #{tpu_custom_call.1} parent=11 // pred_check
          %p198 = pneg %p103
        $region14: #{tpu_custom_call.1} parent=11 // pred_check_branch
          %200 = sbr.rel (%p198) target = $region16
        $region15: #{tpu_custom_call.1} parent=11 // pred_region
          %s201 = smul.u32 32, %s31
          %203 = vsyncadd [#allocation7], 0
          %s204 = sadd.s32 %s29, %s201
          %s205 = smul.addr %s30, 32
          %s206 = sadd.s32 %s204, %s205
          %s207 = smul.addr %s206, 4
          %s208 = scalar_lea.hbm %s1, %s207
          %s209 = sshll.u32 %s208, 4
          %s210 = int_to_ptr.hbm [resolvable:$true] %s209
          %s211 = sshll.u32 [#allocation6], 4
          %s212 = int_to_ptr.vmem [resolvable:$true] %s211
          %217 = dma.hbm_to_vmem [thread:$0]  %s210, 2048, %s212, [#allocation7], 64, 64, 4
        $region16: #{tpu_custom_call.1} parent=11 // pred_fallthru
          _
        // Predicated region
        $region17: #{tpu_custom_call.1} parent=11 // pred_check
          %p218 = pneg %p129
        $region18: #{tpu_custom_call.1} parent=11 // pred_check_branch
          %220 = sbr.rel (%p218) target = $region20
        $region19: #{tpu_custom_call.1} parent=11 // pred_region
          %p221 = scmp.lt.s32.totalorder %s29, 0
          %s222 = scalar_select %p221, %s29, 0
          %s223 = scalar_lea.vmem %s2, %s222
        $region20: #{tpu_custom_call.1} parent=11 // pred_fallthru
          _
        // Predicated region
        $region21: #{tpu_custom_call.1} parent=11 // pred_check
          %p224 = pneg %p155
        $region22: #{tpu_custom_call.1} parent=11 // pred_check_branch
          %226 = sbr.rel (%p224) target = $region24
        $region23: #{tpu_custom_call.1} parent=11 // pred_region
          %p227 = scmp.lt.s32.totalorder %s29, 0
          %s228 = scalar_select %p227, %s29, 0
          %s229 = scalar_lea.vmem %s3, %s228
        $region24: #{tpu_custom_call.1} parent=11 // pred_fallthru
          _
      $region12: #{tpu_custom_call.1} parent=5 // pred_fallthru
        _
      %p230 = scmp.lt.s32.totalorder %s17, 2
      // Predicated region
      $region25: #{tpu_custom_call.1} parent=5 // pred_check
        %p231 = pneg %p230
      $region26: #{tpu_custom_call.1} parent=5 // pred_check_branch
        %233 = sbr.rel (%p231) target = $region28
      $region27: #{tpu_custom_call.1} parent=5 // pred_region
        // Predicated region
        $region29: #{tpu_custom_call.1} parent=27 // pred_check
          %p234 = pneg %p67
        $region30: #{tpu_custom_call.1} parent=27 // pred_check_branch
          %236 = sbr.rel (%p234) target = $region32
        $region31: #{tpu_custom_call.1} parent=27 // pred_region
          %s237 = sand.u32 %s57, 1
          %s238 = scalar_lea.sflag [#allocation4], %s237
          %s239 = sand.u32 %s57, 1
          %s240 = smul.addr %s239, 256
          %s241 = scalar_lea.vmem [#allocation3], %s240
          %s242 = smul.u32 32, %s24
          %s243 = smul.u32 2, %s27
          %245 = vsyncadd %s238, 0
          %s246 = smul.addr %s242, 2
          %s247 = sadd.s32 %s243, %s246
          %s248 = smul.addr %s26, 128
          %s249 = sadd.s32 %s247, %s248
          %s250 = smul.addr %s249, 4
          %s251 = scalar_lea.hbm %s0, %s250
          %s252 = sshll.u32 %s251, 4
          %s253 = int_to_ptr.hbm [resolvable:$true] %s252
          %s254 = sshll.u32 %s241, 4
          %s255 = int_to_ptr.vmem [resolvable:$true] %s254
          %260 = dma.hbm_to_vmem [thread:$0]  %s253, 4096, %s255, %s238, 128, 128, 8
        $region32: #{tpu_custom_call.1} parent=27 // pred_fallthru
          _
      $region28: #{tpu_custom_call.1} parent=5 // pred_fallthru
        _
      %p261 = scmp.le.s32.totalorder 1, %s17
      %p262 = scmp.lt.s32.totalorder %s17, 3
      %p263 = pnand %p261, %p262
      %p264 = pneg %p263
      // Predicated region
      $region33: #{tpu_custom_call.1} parent=5 // pred_check
        _
      $region34: #{tpu_custom_call.1} parent=5 // pred_check_branch
        %266 = sbr.rel (%p263) target = $region36
      $region35: #{tpu_custom_call.1} parent=5 // pred_region
        %s267 = ssub.s32 %s17, 1
        %s268 = sand.u32 %s60, 1
        %s269 = scalar_lea.sflag [#allocation4], %s268
        %s270 = sand.u32 %s60, 1
        %s271 = smul.addr %s270, 256
        %s272 = scalar_lea.vmem [#allocation3], %s271
        // Predicated region
        $region37: #{tpu_custom_call.1} parent=35 // pred_check
          %p273 = pneg %p73
        $region38: #{tpu_custom_call.1} parent=35 // pred_check_branch
          %275 = sbr.rel (%p273) target = $region40
        $region39: #{tpu_custom_call.1} parent=35 // pred_region
          %277 = dma.done %s269, 4096
        $region40: #{tpu_custom_call.1} parent=35 // pred_fallthru
          _
        // Predicated region
        $region41: #{tpu_custom_call.1} parent=35 // pred_check
          %p278 = pneg %p103
        $region42: #{tpu_custom_call.1} parent=35 // pred_check_branch
          %280 = sbr.rel (%p278) target = $region44
        $region43: #{tpu_custom_call.1} parent=35 // pred_region
          %282 = dma.done [#allocation7], 2048
        $region44: #{tpu_custom_call.1} parent=35 // pred_fallthru
          _
        %s283 = sand.u32 %s60, 1
        %s284 = scalar_lea.sflag [#allocation4], %s283
        %s285 = sand.u32 %s60, 1
        %s286 = smul.addr %s285, 256
        %s287 = scalar_lea.vmem [#allocation3], %s286
        %p288 = pneg %p73
        %p289 = pneg %p70
        %p290 = pneg %p103
        %p291 = pneg %p100
        %p292 = scmp.lt.s32.totalorder %s29, 0
        %s293 = scalar_select %p292, %s29, 0
        %s294 = scalar_lea.vmem %s2, %s293
        %p295 = pneg %p129
        %p296 = pneg %p126
        %p297 = scmp.lt.s32.totalorder %s29, 0
        %s298 = scalar_select %p297, %s29, 0
        %s299 = scalar_lea.vmem %s3, %s298
        %p300 = pneg %p155
        %p301 = pneg %p152
        %p302 = pneg %p183
        %p303 = pneg %p180
        %s304 = sand.u32 %s170, 1
        %s305 = scalar_lea.sflag [#allocation5], %s304
        %s306 = sand.u32 %s170, 1
        %s307 = smul.addr %s306, 128
        %s308 = scalar_lea.vmem [#allocation8], %s307
        %s309 = smul.u32 32, %s28
        %s310 = smul.u32 2, %s31
        %s311 = smul.u32 32, %s31
        %p312 = scmp.lt.s32.totalorder %s29, 0
        %s313 = scalar_select %p312, %s29, 0
        %s314 = scalar_lea.vmem %s2, %s313
        %p315 = scmp.lt.s32.totalorder %s29, 0
        %s316 = scalar_select %p315, %s29, 0
        %s317 = scalar_lea.vmem %s3, %s316
        %s318 = smul.u32 32, %s28
        %p319 = scmp.eq.s32.totalorder %s30, 0
        %p320 = scmp.eq.s32.totalorder %s31, 0
        %p321 = pnand %p319, %p320
        %p322 = pneg %p321
        // Predicated region
        $region45: #{tpu_custom_call.1} parent=35 // pred_check
          _
        $region46: #{tpu_custom_call.1} parent=35 // pred_check_branch
          %324 = sbr.rel (%p321) target = $region48
        $region47: #{tpu_custom_call.1} parent=35 // pred_region
          %325 = vst [vmem:[#allocation2] sm:$0xff] 0.0
          %326 = vst [vmem:[#allocation2 + $0x8] sm:$0xff] 0.0
          %327 = vst [vmem:[#allocation2 + $0x10] sm:$0xff] 0.0
          %328 = vst [vmem:[#allocation2 + $0x18] sm:$0xff] 0.0
          %329 = vst [vmem:[#allocation2 + $0x20] sm:$0xff] 0.0
          %330 = vst [vmem:[#allocation2 + $0x28] sm:$0xff] 0.0
          %331 = vst [vmem:[#allocation2 + $0x30] sm:$0xff] 0.0
          %332 = vst [vmem:[#allocation2 + $0x38] sm:$0xff] 0.0
          %333 = vst [vmem:[#allocation2 + $0x40] sm:$0xff] 0.0
          %334 = vst [vmem:[#allocation2 + $0x48] sm:$0xff] 0.0
          %335 = vst [vmem:[#allocation2 + $0x50] sm:$0xff] 0.0
          %336 = vst [vmem:[#allocation2 + $0x58] sm:$0xff] 0.0
          %337 = vst [vmem:[#allocation2 + $0x60] sm:$0xff] 0.0
          %338 = vst [vmem:[#allocation2 + $0x68] sm:$0xff] 0.0
          %339 = vst [vmem:[#allocation2 + $0x70] sm:$0xff] 0.0
          %340 = vst [vmem:[#allocation2 + $0x78] sm:$0xff] 0.0
          %341 = vst [vmem:[#allocation2 + $0x80] sm:$0xff] 0.0
          %342 = vst [vmem:[#allocation2 + $0x88] sm:$0xff] 0.0
          %343 = vst [vmem:[#allocation2 + $0x90] sm:$0xff] 0.0
          %344 = vst [vmem:[#allocation2 + $0x98] sm:$0xff] 0.0
          %345 = vst [vmem:[#allocation2 + $0xa0] sm:$0xff] 0.0
          %346 = vst [vmem:[#allocation2 + $0xa8] sm:$0xff] 0.0
          %347 = vst [vmem:[#allocation2 + $0xb0] sm:$0xff] 0.0
          %348 = vst [vmem:[#allocation2 + $0xb8] sm:$0xff] 0.0
          %349 = vst [vmem:[#allocation2 + $0xc0] sm:$0xff] 0.0
          %350 = vst [vmem:[#allocation2 + $0xc8] sm:$0xff] 0.0
          %351 = vst [vmem:[#allocation2 + $0xd0] sm:$0xff] 0.0
          %352 = vst [vmem:[#allocation2 + $0xd8] sm:$0xff] 0.0
          %353 = vst [vmem:[#allocation2 + $0xe0] sm:$0xff] 0.0
          %354 = vst [vmem:[#allocation2 + $0xe8] sm:$0xff] 0.0
          %355 = vst [vmem:[#allocation2 + $0xf0] sm:$0xff] 0.0
          %356 = vst [vmem:[#allocation2 + $0xf8] sm:$0xff] 0.0
        $region48: #{tpu_custom_call.1} parent=35 // pred_fallthru
          _
        %v357 = vld [vmem:[%s272] sm:$0xff]
        %v358 = vld [vmem:[%s272 + $0x8] sm:$0xff]
        %v359 = vld [vmem:[%s272 + $0x10] sm:$0xff]
        %v360 = vld [vmem:[%s272 + $0x18] sm:$0xff]
        %v361 = vld [vmem:[%s272 + $0x20] sm:$0xff]
        %v362 = vld [vmem:[%s272 + $0x28] sm:$0xff]
        %v363 = vld [vmem:[%s272 + $0x30] sm:$0xff]
        %v364 = vld [vmem:[%s272 + $0x38] sm:$0xff]
        %v365 = vld [vmem:[%s272 + $0x40] sm:$0xff]
        %v366 = vld [vmem:[%s272 + $0x48] sm:$0xff]
        %v367 = vld [vmem:[%s272 + $0x50] sm:$0xff]
        %v368 = vld [vmem:[%s272 + $0x58] sm:$0xff]
        %v369 = vld [vmem:[%s272 + $0x60] sm:$0xff]
        %v370 = vld [vmem:[%s272 + $0x68] sm:$0xff]
        %v371 = vld [vmem:[%s272 + $0x70] sm:$0xff]
        %v372 = vld [vmem:[%s272 + $0x78] sm:$0xff]
        %v373 = vld [vmem:[%s272 + $0x80] sm:$0xff]
        %v374 = vld [vmem:[%s272 + $0x88] sm:$0xff]
        %v375 = vld [vmem:[%s272 + $0x90] sm:$0xff]
        %v376 = vld [vmem:[%s272 + $0x98] sm:$0xff]
        %v377 = vld [vmem:[%s272 + $0xa0] sm:$0xff]
        %v378 = vld [vmem:[%s272 + $0xa8] sm:$0xff]
        %v379 = vld [vmem:[%s272 + $0xb0] sm:$0xff]
        %v380 = vld [vmem:[%s272 + $0xb8] sm:$0xff]
        %v381 = vld [vmem:[%s272 + $0xc0] sm:$0xff]
        %v382 = vld [vmem:[%s272 + $0xc8] sm:$0xff]
        %v383 = vld [vmem:[%s272 + $0xd0] sm:$0xff]
        %v384 = vld [vmem:[%s272 + $0xd8] sm:$0xff]
        %v385 = vld [vmem:[%s272 + $0xe0] sm:$0xff]
        %v386 = vld [vmem:[%s272 + $0xe8] sm:$0xff]
        %v387 = vld [vmem:[%s272 + $0xf0] sm:$0xff]
        %v388 = vld [vmem:[%s272 + $0xf8] sm:$0xff]
        %v389 = vld [vmem:[#allocation2] sm:$0xff]
        %v390 = vld [vmem:[#allocation2 + $0x8] sm:$0xff]
        %v391 = vld [vmem:[#allocation2 + $0x10] sm:$0xff]
        %v392 = vld [vmem:[#allocation2 + $0x18] sm:$0xff]
        %v393 = vld [vmem:[#allocation2 + $0x20] sm:$0xff]
        %v394 = vld [vmem:[#allocation2 + $0x28] sm:$0xff]
        %v395 = vld [vmem:[#allocation2 + $0x30] sm:$0xff]
        %v396 = vld [vmem:[#allocation2 + $0x38] sm:$0xff]
        %v397 = vld [vmem:[#allocation2 + $0x40] sm:$0xff]
        %v398 = vld [vmem:[#allocation2 + $0x48] sm:$0xff]
        %v399 = vld [vmem:[#allocation2 + $0x50] sm:$0xff]
        %v400 = vld [vmem:[#allocation2 + $0x58] sm:$0xff]
        %v401 = vld [vmem:[#allocation2 + $0x60] sm:$0xff]
        %v402 = vld [vmem:[#allocation2 + $0x68] sm:$0xff]
        %v403 = vld [vmem:[#allocation2 + $0x70] sm:$0xff]
        %v404 = vld [vmem:[#allocation2 + $0x78] sm:$0xff]
        %v405 = vld [vmem:[#allocation2 + $0x80] sm:$0xff]
        %v406 = vld [vmem:[#allocation2 + $0x88] sm:$0xff]
        %v407 = vld [vmem:[#allocation2 + $0x90] sm:$0xff]
        %v408 = vld [vmem:[#allocation2 + $0x98] sm:$0xff]
        %v409 = vld [vmem:[#allocation2 + $0xa0] sm:$0xff]
        %v410 = vld [vmem:[#allocation2 + $0xa8] sm:$0xff]
        %v411 = vld [vmem:[#allocation2 + $0xb0] sm:$0xff]
        %v412 = vld [vmem:[#allocation2 + $0xb8] sm:$0xff]
        %v413 = vld [vmem:[#allocation2 + $0xc0] sm:$0xff]
        %v414 = vld [vmem:[#allocation2 + $0xc8] sm:$0xff]
        %v415 = vld [vmem:[#allocation2 + $0xd0] sm:$0xff]
        %v416 = vld [vmem:[#allocation2 + $0xd8] sm:$0xff]
        %v417 = vld [vmem:[#allocation2 + $0xe0] sm:$0xff]
        %v418 = vld [vmem:[#allocation2 + $0xe8] sm:$0xff]
        %v419 = vld [vmem:[#allocation2 + $0xf0] sm:$0xff]
        %v420 = vld [vmem:[#allocation2 + $0xf8] sm:$0xff]
        %v421 = vld [vmem:[#allocation6] sm:$0xf]
        %v422 = vld [vmem:[#allocation6 + $0x4] sm:$0xf]
        %v423 = vld [vmem:[#allocation6 + $0x8] sm:$0xf]
        %v424 = vld [vmem:[#allocation6 + $0xc] sm:$0xf]
        %v425 = vld [vmem:[#allocation6 + $0x10] sm:$0xf]
        %v426 = vld [vmem:[#allocation6 + $0x14] sm:$0xf]
        %v427 = vld [vmem:[#allocation6 + $0x18] sm:$0xf]
        %v428 = vld [vmem:[#allocation6 + $0x1c] sm:$0xf]
        %v429 = vld [vmem:[#allocation6 + $0x20] sm:$0xf]
        %v430 = vld [vmem:[#allocation6 + $0x24] sm:$0xf]
        %v431 = vld [vmem:[#allocation6 + $0x28] sm:$0xf]
        %v432 = vld [vmem:[#allocation6 + $0x2c] sm:$0xf]
        %v433 = vld [vmem:[#allocation6 + $0x30] sm:$0xf]
        %v434 = vld [vmem:[#allocation6 + $0x34] sm:$0xf]
        %v435 = vld [vmem:[#allocation6 + $0x38] sm:$0xf]
        %v436 = vld [vmem:[#allocation6 + $0x3c] sm:$0xf]
        %v437 = vld [vmem:[#allocation6 + $0x40] sm:$0xf]
        %v438 = vld [vmem:[#allocation6 + $0x44] sm:$0xf]
        %v439 = vld [vmem:[#allocation6 + $0x48] sm:$0xf]
        %v440 = vld [vmem:[#allocation6 + $0x4c] sm:$0xf]
        %v441 = vld [vmem:[#allocation6 + $0x50] sm:$0xf]
        %v442 = vld [vmem:[#allocation6 + $0x54] sm:$0xf]
        %v443 = vld [vmem:[#allocation6 + $0x58] sm:$0xf]
        %v444 = vld [vmem:[#allocation6 + $0x5c] sm:$0xf]
        %v445 = vld [vmem:[#allocation6 + $0x60] sm:$0xf]
        %v446 = vld [vmem:[#allocation6 + $0x64] sm:$0xf]
        %v447 = vld [vmem:[#allocation6 + $0x68] sm:$0xf]
        %v448 = vld [vmem:[#allocation6 + $0x6c] sm:$0xf]
        %v449 = vld [vmem:[#allocation6 + $0x70] sm:$0xf]
        %v450 = vld [vmem:[#allocation6 + $0x74] sm:$0xf]
        %v451 = vld [vmem:[#allocation6 + $0x78] sm:$0xf]
        %v452 = vld [vmem:[#allocation6 + $0x7c] sm:$0xf]
        %v485 = vunpack.c.l.b16 %v357
        %v486 = vunpack.c.h.b16 %v357
        %v487 = vunpack.c.l.b16 %v358
        %v488 = vunpack.c.h.b16 %v358
        %v489 = vunpack.c.l.b16 %v359
        %v490 = vunpack.c.h.b16 %v359
        %v491 = vunpack.c.l.b16 %v360
        %v492 = vunpack.c.h.b16 %v360
        %v493 = vunpack.c.l.b16 %v361
        %v494 = vunpack.c.h.b16 %v361
        %v495 = vunpack.c.l.b16 %v362
        %v496 = vunpack.c.h.b16 %v362
        %v497 = vunpack.c.l.b16 %v363
        %v498 = vunpack.c.h.b16 %v363
        %v499 = vunpack.c.l.b16 %v364
        %v500 = vunpack.c.h.b16 %v364
        %v501 = vunpack.c.l.b16 %v365
        %v502 = vunpack.c.h.b16 %v365
        %v503 = vunpack.c.l.b16 %v366
        %v504 = vunpack.c.h.b16 %v366
        %v505 = vunpack.c.l.b16 %v367
        %v506 = vunpack.c.h.b16 %v367
        %v507 = vunpack.c.l.b16 %v368
        %v508 = vunpack.c.h.b16 %v368
        %v509 = vunpack.c.l.b16 %v369
        %v510 = vunpack.c.h.b16 %v369
        %v511 = vunpack.c.l.b16 %v370
        %v512 = vunpack.c.h.b16 %v370
        %v513 = vunpack.c.l.b16 %v371
        %v514 = vunpack.c.h.b16 %v371
        %v515 = vunpack.c.l.b16 %v372
        %v516 = vunpack.c.h.b16 %v372
        %v517 = vunpack.c.l.b16 %v373
        %v518 = vunpack.c.h.b16 %v373
        %v519 = vunpack.c.l.b16 %v374
        %v520 = vunpack.c.h.b16 %v374
        %v521 = vunpack.c.l.b16 %v375
        %v522 = vunpack.c.h.b16 %v375
        %v523 = vunpack.c.l.b16 %v376
        %v524 = vunpack.c.h.b16 %v376
        %v525 = vunpack.c.l.b16 %v377
        %v526 = vunpack.c.h.b16 %v377
        %v527 = vunpack.c.l.b16 %v378
        %v528 = vunpack.c.h.b16 %v378
        %v529 = vunpack.c.l.b16 %v379
        %v530 = vunpack.c.h.b16 %v379
        %v531 = vunpack.c.l.b16 %v380
        %v532 = vunpack.c.h.b16 %v380
        %v533 = vunpack.c.l.b16 %v381
        %v534 = vunpack.c.h.b16 %v381
        %v535 = vunpack.c.l.b16 %v382
        %v536 = vunpack.c.h.b16 %v382
        %v537 = vunpack.c.l.b16 %v383
        %v538 = vunpack.c.h.b16 %v383
        %v539 = vunpack.c.l.b16 %v384
        %v540 = vunpack.c.h.b16 %v384
        %v541 = vunpack.c.l.b16 %v385
        %v542 = vunpack.c.h.b16 %v385
        %v543 = vunpack.c.l.b16 %v386
        %v544 = vunpack.c.h.b16 %v386
        %v545 = vunpack.c.l.b16 %v387
        %v546 = vunpack.c.h.b16 %v387
        %v547 = vunpack.c.l.b16 %v388
        %v548 = vunpack.c.h.b16 %v388
        %v549 = vpack.c.b16 %v487, %v485
        %v550 = vpack.c.b16 %v488, %v486
        %v551 = vpack.c.b16 %v491, %v489
        %v552 = vpack.c.b16 %v492, %v490
        %v553 = vpack.c.b16 %v495, %v493
        %v554 = vpack.c.b16 %v496, %v494
        %v555 = vpack.c.b16 %v499, %v497
        %v556 = vpack.c.b16 %v500, %v498
        %v557 = vpack.c.b16 %v503, %v501
        %v558 = vpack.c.b16 %v504, %v502
        %v559 = vpack.c.b16 %v507, %v505
        %v560 = vpack.c.b16 %v508, %v506
        %v561 = vpack.c.b16 %v511, %v509
        %v562 = vpack.c.b16 %v512, %v510
        %v563 = vpack.c.b16 %v515, %v513
        %v564 = vpack.c.b16 %v516, %v514
        %v565 = vpack.c.b16 %v519, %v517
        %v566 = vpack.c.b16 %v520, %v518
        %v567 = vpack.c.b16 %v523, %v521
        %v568 = vpack.c.b16 %v524, %v522
        %v569 = vpack.c.b16 %v527, %v525
        %v570 = vpack.c.b16 %v528, %v526
        %v571 = vpack.c.b16 %v531, %v529
        %v572 = vpack.c.b16 %v532, %v530
        %v573 = vpack.c.b16 %v535, %v533
        %v574 = vpack.c.b16 %v536, %v534
        %v575 = vpack.c.b16 %v539, %v537
        %v576 = vpack.c.b16 %v540, %v538
        %v577 = vpack.c.b16 %v543, %v541
        %v578 = vpack.c.b16 %v544, %v542
        %v579 = vpack.c.b16 %v547, %v545
        %v580 = vpack.c.b16 %v548, %v546
        %v645 = vunpack.c.l.b16 %v421
        %v646 = vunpack.c.l.b16 %v422
        %v647 = vunpack.c.l.b16 %v423
        %v648 = vunpack.c.l.b16 %v424
        %v649 = vunpack.c.l.b16 %v425
        %v650 = vunpack.c.l.b16 %v426
        %v651 = vunpack.c.l.b16 %v427
        %v652 = vunpack.c.l.b16 %v428
        %v653 = vunpack.c.l.b16 %v429
        %v654 = vunpack.c.l.b16 %v430
        %v655 = vunpack.c.l.b16 %v431
        %v656 = vunpack.c.l.b16 %v432
        %v657 = vunpack.c.l.b16 %v433
        %v658 = vunpack.c.l.b16 %v434
        %v659 = vunpack.c.l.b16 %v435
        %v660 = vunpack.c.l.b16 %v436
        %v661 = vunpack.c.l.b16 %v437
        %v662 = vunpack.c.l.b16 %v438
        %v663 = vunpack.c.l.b16 %v439
        %v664 = vunpack.c.l.b16 %v440
        %v665 = vunpack.c.l.b16 %v441
        %v666 = vunpack.c.l.b16 %v442
        %v667 = vunpack.c.l.b16 %v443
        %v668 = vunpack.c.l.b16 %v444
        %v669 = vunpack.c.l.b16 %v445
        %v670 = vunpack.c.l.b16 %v446
        %v671 = vunpack.c.l.b16 %v447
        %v672 = vunpack.c.l.b16 %v448
        %v673 = vunpack.c.l.b16 %v449
        %v674 = vunpack.c.l.b16 %v450
        %v675 = vunpack.c.l.b16 %v451
        %v676 = vunpack.c.l.b16 %v452
        %v677 = vpack.c.b16 %v646, %v645
        %v678 = vpack.c.b16 %v648, %v647
        %v679 = vpack.c.b16 %v650, %v649
        %v680 = vpack.c.b16 %v652, %v651
        %v681 = vpack.c.b16 %v654, %v653
        %v682 = vpack.c.b16 %v656, %v655
        %v683 = vpack.c.b16 %v658, %v657
        %v684 = vpack.c.b16 %v660, %v659
        %v685 = vpack.c.b16 %v662, %v661
        %v686 = vpack.c.b16 %v664, %v663
        %v687 = vpack.c.b16 %v666, %v665
        %v688 = vpack.c.b16 %v668, %v667
        %v689 = vpack.c.b16 %v670, %v669
        %v690 = vpack.c.b16 %v672, %v671
        %v691 = vpack.c.b16 %v674, %v673
        %v692 = vpack.c.b16 %v676, %v675
        %709 = vmatpush.bf16.msra.mxu0 %v684
        %710 = vmatpush.bf16.msra.mxu0 %v683
        %711 = vmatpush.bf16.msra.mxu0 %v682
        %712 = vmatpush.bf16.msra.mxu0 %v681
        %713 = vmatpush.bf16.msra.mxu0 %v680
        %714 = vmatpush.bf16.msra.mxu0 %v679
        %715 = vmatpush.bf16.msra.mxu0 %v678
        %716 = vmatpush.bf16.msra.mxu0 %v677
        %717 = vmatmul.bf16.gmra.mxu0 %v549
        %v718 = vpop.f32.mrf.mxu0
        %v719 = vadd.f32 0.0, %v718
        %v720 = vpop.f32.mrf.mxu0
        %v721 = vadd.f32 0.0, %v720
        %722 = vmatmul.bf16.gmra.mxu0 %v551
        %v723 = vpop.f32.mrf.mxu0
        %v724 = vadd.f32 0.0, %v723
        %v725 = vpop.f32.mrf.mxu0
        %v726 = vadd.f32 0.0, %v725
        %727 = vmatmul.bf16.gmra.mxu0 %v553
        %v728 = vpop.f32.mrf.mxu0
        %v729 = vadd.f32 0.0, %v728
        %v730 = vpop.f32.mrf.mxu0
        %v731 = vadd.f32 0.0, %v730
        %732 = vmatmul.bf16.gmra.mxu0 %v555
        %v733 = vpop.f32.mrf.mxu0
        %v734 = vadd.f32 0.0, %v733
        %v735 = vpop.f32.mrf.mxu0
        %v736 = vadd.f32 0.0, %v735
        %737 = vmatmul.bf16.gmra.mxu0 %v557
        %v738 = vpop.f32.mrf.mxu0
        %v739 = vadd.f32 0.0, %v738
        %v740 = vpop.f32.mrf.mxu0
        %v741 = vadd.f32 0.0, %v740
        %742 = vmatmul.bf16.gmra.mxu0 %v559
        %v743 = vpop.f32.mrf.mxu0
        %v744 = vadd.f32 0.0, %v743
        %v745 = vpop.f32.mrf.mxu0
        %v746 = vadd.f32 0.0, %v745
        %747 = vmatmul.bf16.gmra.mxu0 %v561
        %v748 = vpop.f32.mrf.mxu0
        %v749 = vadd.f32 0.0, %v748
        %v750 = vpop.f32.mrf.mxu0
        %v751 = vadd.f32 0.0, %v750
        %752 = vmatmul.bf16.gmra.mxu0 %v563
        %v753 = vpop.f32.mrf.mxu0
        %v754 = vadd.f32 0.0, %v753
        %v755 = vpop.f32.mrf.mxu0
        %v756 = vadd.f32 0.0, %v755
        %757 = vmatmul.bf16.gmra.mxu0 %v565
        %v758 = vpop.f32.mrf.mxu0
        %v759 = vadd.f32 0.0, %v758
        %v760 = vpop.f32.mrf.mxu0
        %v761 = vadd.f32 0.0, %v760
        %762 = vmatmul.bf16.gmra.mxu0 %v567
        %v763 = vpop.f32.mrf.mxu0
        %v764 = vadd.f32 0.0, %v763
        %v765 = vpop.f32.mrf.mxu0
        %v766 = vadd.f32 0.0, %v765
        %767 = vmatmul.bf16.gmra.mxu0 %v569
        %v768 = vpop.f32.mrf.mxu0
        %v769 = vadd.f32 0.0, %v768
        %v770 = vpop.f32.mrf.mxu0
        %v771 = vadd.f32 0.0, %v770
        %772 = vmatmul.bf16.gmra.mxu0 %v571
        %v773 = vpop.f32.mrf.mxu0
        %v774 = vadd.f32 0.0, %v773
        %v775 = vpop.f32.mrf.mxu0
        %v776 = vadd.f32 0.0, %v775
        %777 = vmatmul.bf16.gmra.mxu0 %v573
        %v778 = vpop.f32.mrf.mxu0
        %v779 = vadd.f32 0.0, %v778
        %v780 = vpop.f32.mrf.mxu0
        %v781 = vadd.f32 0.0, %v780
        %782 = vmatmul.bf16.gmra.mxu0 %v575
        %v783 = vpop.f32.mrf.mxu0
        %v784 = vadd.f32 0.0, %v783
        %v785 = vpop.f32.mrf.mxu0
        %v786 = vadd.f32 0.0, %v785
        %787 = vmatmul.bf16.gmra.mxu0 %v577
        %v788 = vpop.f32.mrf.mxu0
        %v789 = vadd.f32 0.0, %v788
        %v790 = vpop.f32.mrf.mxu0
        %v791 = vadd.f32 0.0, %v790
        %792 = vmatmul.bf16.gmra.mxu0 %v579
        %v793 = vpop.f32.mrf.mxu0
        %v794 = vadd.f32 0.0, %v793
        %v795 = vpop.f32.mrf.mxu0
        %v796 = vadd.f32 0.0, %v795
        %797 = vdwg.mxu0
        %798 = vmatpush.bf16.msra.mxu0 %v692
        %799 = vmatpush.bf16.msra.mxu0 %v691
        %800 = vmatpush.bf16.msra.mxu0 %v690
        %801 = vmatpush.bf16.msra.mxu0 %v689
        %802 = vmatpush.bf16.msra.mxu0 %v688
        %803 = vmatpush.bf16.msra.mxu0 %v687
        %804 = vmatpush.bf16.msra.mxu0 %v686
        %805 = vmatpush.bf16.msra.mxu0 %v685
        %806 = vmatmul.bf16.gmra.mxu0 %v550
        %v807 = vpop.f32.mrf.mxu0
        %v808 = vadd.f32 %v719, %v807
        %v809 = vpop.f32.mrf.mxu0
        %v810 = vadd.f32 %v721, %v809
        %811 = vmatmul.bf16.gmra.mxu0 %v552
        %v812 = vpop.f32.mrf.mxu0
        %v813 = vadd.f32 %v724, %v812
        %v814 = vpop.f32.mrf.mxu0
        %v815 = vadd.f32 %v726, %v814
        %816 = vmatmul.bf16.gmra.mxu0 %v554
        %v817 = vpop.f32.mrf.mxu0
        %v818 = vadd.f32 %v729, %v817
        %v819 = vpop.f32.mrf.mxu0
        %v820 = vadd.f32 %v731, %v819
        %821 = vmatmul.bf16.gmra.mxu0 %v556
        %v822 = vpop.f32.mrf.mxu0
        %v823 = vadd.f32 %v734, %v822
        %v824 = vpop.f32.mrf.mxu0
        %v825 = vadd.f32 %v736, %v824
        %826 = vmatmul.bf16.gmra.mxu0 %v558
        %v827 = vpop.f32.mrf.mxu0
        %v828 = vadd.f32 %v739, %v827
        %v829 = vpop.f32.mrf.mxu0
        %v830 = vadd.f32 %v741, %v829
        %831 = vmatmul.bf16.gmra.mxu0 %v560
        %v832 = vpop.f32.mrf.mxu0
        %v833 = vadd.f32 %v744, %v832
        %v834 = vpop.f32.mrf.mxu0
        %v835 = vadd.f32 %v746, %v834
        %836 = vmatmul.bf16.gmra.mxu0 %v562
        %v837 = vpop.f32.mrf.mxu0
        %v838 = vadd.f32 %v749, %v837
        %v839 = vpop.f32.mrf.mxu0
        %v840 = vadd.f32 %v751, %v839
        %841 = vmatmul.bf16.gmra.mxu0 %v564
        %v842 = vpop.f32.mrf.mxu0
        %v843 = vadd.f32 %v754, %v842
        %v844 = vpop.f32.mrf.mxu0
        %v845 = vadd.f32 %v756, %v844
        %846 = vmatmul.bf16.gmra.mxu0 %v566
        %v847 = vpop.f32.mrf.mxu0
        %v848 = vadd.f32 %v759, %v847
        %v849 = vpop.f32.mrf.mxu0
        %v850 = vadd.f32 %v761, %v849
        %851 = vmatmul.bf16.gmra.mxu0 %v568
        %v852 = vpop.f32.mrf.mxu0
        %v853 = vadd.f32 %v764, %v852
        %v854 = vpop.f32.mrf.mxu0
        %v855 = vadd.f32 %v766, %v854
        %856 = vmatmul.bf16.gmra.mxu0 %v570
        %v857 = vpop.f32.mrf.mxu0
        %v858 = vadd.f32 %v769, %v857
        %v859 = vpop.f32.mrf.mxu0
        %v860 = vadd.f32 %v771, %v859
        %861 = vmatmul.bf16.gmra.mxu0 %v572
        %v862 = vpop.f32.mrf.mxu0
        %v863 = vadd.f32 %v774, %v862
        %v864 = vpop.f32.mrf.mxu0
        %v865 = vadd.f32 %v776, %v864
        %866 = vmatmul.bf16.gmra.mxu0 %v574
        %v867 = vpop.f32.mrf.mxu0
        %v868 = vadd.f32 %v779, %v867
        %v869 = vpop.f32.mrf.mxu0
        %v870 = vadd.f32 %v781, %v869
        %871 = vmatmul.bf16.gmra.mxu0 %v576
        %v872 = vpop.f32.mrf.mxu0
        %v873 = vadd.f32 %v784, %v872
        %v874 = vpop.f32.mrf.mxu0
        %v875 = vadd.f32 %v786, %v874
        %876 = vmatmul.bf16.gmra.mxu0 %v578
        %v877 = vpop.f32.mrf.mxu0
        %v878 = vadd.f32 %v789, %v877
        %v879 = vpop.f32.mrf.mxu0
        %v880 = vadd.f32 %v791, %v879
        %881 = vmatmul.bf16.gmra.mxu0 %v580
        %v882 = vpop.f32.mrf.mxu0
        %v883 = vadd.f32 %v794, %v882
        %v884 = vpop.f32.mrf.mxu0
        %v885 = vadd.f32 %v796, %v884
        %886 = vdwg.mxu0
        %v887 = vadd.f32 %v389, %v808
        %v888 = vadd.f32 %v390, %v810
        %v889 = vadd.f32 %v391, %v813
        %v890 = vadd.f32 %v392, %v815
        %v891 = vadd.f32 %v393, %v818
        %v892 = vadd.f32 %v394, %v820
        %v893 = vadd.f32 %v395, %v823
        %v894 = vadd.f32 %v396, %v825
        %v895 = vadd.f32 %v397, %v828
        %v896 = vadd.f32 %v398, %v830
        %v897 = vadd.f32 %v399, %v833
        %v898 = vadd.f32 %v400, %v835
        %v899 = vadd.f32 %v401, %v838
        %v900 = vadd.f32 %v402, %v840
        %v901 = vadd.f32 %v403, %v843
        %v902 = vadd.f32 %v404, %v845
        %v903 = vadd.f32 %v405, %v848
        %v904 = vadd.f32 %v406, %v850
        %v905 = vadd.f32 %v407, %v853
        %v906 = vadd.f32 %v408, %v855
        %v907 = vadd.f32 %v409, %v858
        %v908 = vadd.f32 %v410, %v860
        %v909 = vadd.f32 %v411, %v863
        %v910 = vadd.f32 %v412, %v865
        %v911 = vadd.f32 %v413, %v868
        %v912 = vadd.f32 %v414, %v870
        %v913 = vadd.f32 %v415, %v873
        %v914 = vadd.f32 %v416, %v875
        %v915 = vadd.f32 %v417, %v878
        %v916 = vadd.f32 %v418, %v880
        %v917 = vadd.f32 %v419, %v883
        %v918 = vadd.f32 %v420, %v885
        %919 = vst [vmem:[#allocation2] sm:$0xff] %v887
        %920 = vst [vmem:[#allocation2 + $0x8] sm:$0xff] %v888
        %921 = vst [vmem:[#allocation2 + $0x10] sm:$0xff] %v889
        %922 = vst [vmem:[#allocation2 + $0x18] sm:$0xff] %v890
        %923 = vst [vmem:[#allocation2 + $0x20] sm:$0xff] %v891
        %924 = vst [vmem:[#allocation2 + $0x28] sm:$0xff] %v892
        %925 = vst [vmem:[#allocation2 + $0x30] sm:$0xff] %v893
        %926 = vst [vmem:[#allocation2 + $0x38] sm:$0xff] %v894
        %927 = vst [vmem:[#allocation2 + $0x40] sm:$0xff] %v895
        %928 = vst [vmem:[#allocation2 + $0x48] sm:$0xff] %v896
        %929 = vst [vmem:[#allocation2 + $0x50] sm:$0xff] %v897
        %930 = vst [vmem:[#allocation2 + $0x58] sm:$0xff] %v898
        %931 = vst [vmem:[#allocation2 + $0x60] sm:$0xff] %v899
        %932 = vst [vmem:[#allocation2 + $0x68] sm:$0xff] %v900
        %933 = vst [vmem:[#allocation2 + $0x70] sm:$0xff] %v901
        %934 = vst [vmem:[#allocation2 + $0x78] sm:$0xff] %v902
        %935 = vst [vmem:[#allocation2 + $0x80] sm:$0xff] %v903
        %936 = vst [vmem:[#allocation2 + $0x88] sm:$0xff] %v904
        %937 = vst [vmem:[#allocation2 + $0x90] sm:$0xff] %v905
        %938 = vst [vmem:[#allocation2 + $0x98] sm:$0xff] %v906
        %939 = vst [vmem:[#allocation2 + $0xa0] sm:$0xff] %v907
        %940 = vst [vmem:[#allocation2 + $0xa8] sm:$0xff] %v908
        %941 = vst [vmem:[#allocation2 + $0xb0] sm:$0xff] %v909
        %942 = vst [vmem:[#allocation2 + $0xb8] sm:$0xff] %v910
        %943 = vst [vmem:[#allocation2 + $0xc0] sm:$0xff] %v911
        %944 = vst [vmem:[#allocation2 + $0xc8] sm:$0xff] %v912
        %945 = vst [vmem:[#allocation2 + $0xd0] sm:$0xff] %v913
        %946 = vst [vmem:[#allocation2 + $0xd8] sm:$0xff] %v914
        %947 = vst [vmem:[#allocation2 + $0xe0] sm:$0xff] %v915
        %948 = vst [vmem:[#allocation2 + $0xe8] sm:$0xff] %v916
        %949 = vst [vmem:[#allocation2 + $0xf0] sm:$0xff] %v917
        %950 = vst [vmem:[#allocation2 + $0xf8] sm:$0xff] %v918
        // Predicated region
        $region49: #{tpu_custom_call.1} parent=35 // pred_check
          _
        $region50: #{tpu_custom_call.1} parent=35 // pred_check_branch
          %952 = sbr.rel (%p321) target = $region52
        $region51: #{tpu_custom_call.1} parent=35 // pred_region
          %v953 = vld [vmem:[#allocation2] sm:$0xff]
          %v954 = vld [vmem:[#allocation2 + $0x8] sm:$0xff]
          %v955 = vld [vmem:[#allocation2 + $0x10] sm:$0xff]
          %v956 = vld [vmem:[#allocation2 + $0x18] sm:$0xff]
          %v957 = vld [vmem:[#allocation2 + $0x20] sm:$0xff]
          %v958 = vld [vmem:[#allocation2 + $0x28] sm:$0xff]
          %v959 = vld [vmem:[#allocation2 + $0x30] sm:$0xff]
          %v960 = vld [vmem:[#allocation2 + $0x38] sm:$0xff]
          %v961 = vld [vmem:[#allocation2 + $0x40] sm:$0xff]
          %v962 = vld [vmem:[#allocation2 + $0x48] sm:$0xff]
          %v963 = vld [vmem:[#allocation2 + $0x50] sm:$0xff]
          %v964 = vld [vmem:[#allocation2 + $0x58] sm:$0xff]
          %v965 = vld [vmem:[#allocation2 + $0x60] sm:$0xff]
          %v966 = vld [vmem:[#allocation2 + $0x68] sm:$0xff]
          %v967 = vld [vmem:[#allocation2 + $0x70] sm:$0xff]
          %v968 = vld [vmem:[#allocation2 + $0x78] sm:$0xff]
          %v969 = vld [vmem:[#allocation2 + $0x80] sm:$0xff]
          %v970 = vld [vmem:[#allocation2 + $0x88] sm:$0xff]
          %v971 = vld [vmem:[#allocation2 + $0x90] sm:$0xff]
          %v972 = vld [vmem:[#allocation2 + $0x98] sm:$0xff]
          %v973 = vld [vmem:[#allocation2 + $0xa0] sm:$0xff]
          %v974 = vld [vmem:[#allocation2 + $0xa8] sm:$0xff]
          %v975 = vld [vmem:[#allocation2 + $0xb0] sm:$0xff]
          %v976 = vld [vmem:[#allocation2 + $0xb8] sm:$0xff]
          %v977 = vld [vmem:[#allocation2 + $0xc0] sm:$0xff]
          %v978 = vld [vmem:[#allocation2 + $0xc8] sm:$0xff]
          %v979 = vld [vmem:[#allocation2 + $0xd0] sm:$0xff]
          %v980 = vld [vmem:[#allocation2 + $0xd8] sm:$0xff]
          %v981 = vld [vmem:[#allocation2 + $0xe0] sm:$0xff]
          %v982 = vld [vmem:[#allocation2 + $0xe8] sm:$0xff]
          %v983 = vld [vmem:[#allocation2 + $0xf0] sm:$0xff]
          %v984 = vld [vmem:[#allocation2 + $0xf8] sm:$0xff]
          %v985 = vld [vmem:[%s314] sm:$0x1]
          %v987 = vperm.slane %v985, 0
          %v989 = vmul.f32 %v953, %v987
          %v990 = vmul.f32 %v954, %v987
          %v991 = vmul.f32 %v955, %v987
          %v992 = vmul.f32 %v956, %v987
          %v993 = vmul.f32 %v957, %v987
          %v994 = vmul.f32 %v958, %v987
          %v995 = vmul.f32 %v959, %v987
          %v996 = vmul.f32 %v960, %v987
          %v997 = vmul.f32 %v961, %v987
          %v998 = vmul.f32 %v962, %v987
          %v999 = vmul.f32 %v963, %v987
          %v1000 = vmul.f32 %v964, %v987
          %v1001 = vmul.f32 %v965, %v987
          %v1002 = vmul.f32 %v966, %v987
          %v1003 = vmul.f32 %v967, %v987
          %v1004 = vmul.f32 %v968, %v987
          %v1005 = vmul.f32 %v969, %v987
          %v1006 = vmul.f32 %v970, %v987
          %v1007 = vmul.f32 %v971, %v987
          %v1008 = vmul.f32 %v972, %v987
          %v1009 = vmul.f32 %v973, %v987
          %v1010 = vmul.f32 %v974, %v987
          %v1011 = vmul.f32 %v975, %v987
          %v1012 = vmul.f32 %v976, %v987
          %v1013 = vmul.f32 %v977, %v987
          %v1014 = vmul.f32 %v978, %v987
          %v1015 = vmul.f32 %v979, %v987
          %v1016 = vmul.f32 %v980, %v987
          %v1017 = vmul.f32 %v981, %v987
          %v1018 = vmul.f32 %v982, %v987
          %v1019 = vmul.f32 %v983, %v987
          %v1020 = vmul.f32 %v984, %v987
          %v1021 = vld [vmem:[%s317] sm:$0x1]
          %v1023 = vperm.slane %v1021, 0
          %v1025 = vadd.f32 %v989, %v1023
          %v1026 = vadd.f32 %v990, %v1023
          %v1027 = vadd.f32 %v991, %v1023
          %v1028 = vadd.f32 %v992, %v1023
          %v1029 = vadd.f32 %v993, %v1023
          %v1030 = vadd.f32 %v994, %v1023
          %v1031 = vadd.f32 %v995, %v1023
          %v1032 = vadd.f32 %v996, %v1023
          %v1033 = vadd.f32 %v997, %v1023
          %v1034 = vadd.f32 %v998, %v1023
          %v1035 = vadd.f32 %v999, %v1023
          %v1036 = vadd.f32 %v1000, %v1023
          %v1037 = vadd.f32 %v1001, %v1023
          %v1038 = vadd.f32 %v1002, %v1023
          %v1039 = vadd.f32 %v1003, %v1023
          %v1040 = vadd.f32 %v1004, %v1023
          %v1041 = vadd.f32 %v1005, %v1023
          %v1042 = vadd.f32 %v1006, %v1023
          %v1043 = vadd.f32 %v1007, %v1023
          %v1044 = vadd.f32 %v1008, %v1023
          %v1045 = vadd.f32 %v1009, %v1023
          %v1046 = vadd.f32 %v1010, %v1023
          %v1047 = vadd.f32 %v1011, %v1023
          %v1048 = vadd.f32 %v1012, %v1023
          %v1049 = vadd.f32 %v1013, %v1023
          %v1050 = vadd.f32 %v1014, %v1023
          %v1051 = vadd.f32 %v1015, %v1023
          %v1052 = vadd.f32 %v1016, %v1023
          %v1053 = vadd.f32 %v1017, %v1023
          %v1054 = vadd.f32 %v1018, %v1023
          %v1055 = vadd.f32 %v1019, %v1023
          %v1056 = vadd.f32 %v1020, %v1023
          %v1057 = vmax.f32 %v1025, 0.0
          %v1058 = vmax.f32 %v1026, 0.0
          %v1059 = vmax.f32 %v1027, 0.0
          %v1060 = vmax.f32 %v1028, 0.0
          %v1061 = vmax.f32 %v1029, 0.0
          %v1062 = vmax.f32 %v1030, 0.0
          %v1063 = vmax.f32 %v1031, 0.0
          %v1064 = vmax.f32 %v1032, 0.0
          %v1065 = vmax.f32 %v1033, 0.0
          %v1066 = vmax.f32 %v1034, 0.0
          %v1067 = vmax.f32 %v1035, 0.0
          %v1068 = vmax.f32 %v1036, 0.0
          %v1069 = vmax.f32 %v1037, 0.0
          %v1070 = vmax.f32 %v1038, 0.0
          %v1071 = vmax.f32 %v1039, 0.0
          %v1072 = vmax.f32 %v1040, 0.0
          %v1073 = vmax.f32 %v1041, 0.0
          %v1074 = vmax.f32 %v1042, 0.0
          %v1075 = vmax.f32 %v1043, 0.0
          %v1076 = vmax.f32 %v1044, 0.0
          %v1077 = vmax.f32 %v1045, 0.0
          %v1078 = vmax.f32 %v1046, 0.0
          %v1079 = vmax.f32 %v1047, 0.0
          %v1080 = vmax.f32 %v1048, 0.0
          %v1081 = vmax.f32 %v1049, 0.0
          %v1082 = vmax.f32 %v1050, 0.0
          %v1083 = vmax.f32 %v1051, 0.0
          %v1084 = vmax.f32 %v1052, 0.0
          %v1085 = vmax.f32 %v1053, 0.0
          %v1086 = vmax.f32 %v1054, 0.0
          %v1087 = vmax.f32 %v1055, 0.0
          %v1088 = vmax.f32 %v1056, 0.0
          %v1089 = vpack.c.bf16 %v1057, %v1057
          %v1090 = vpack.c.bf16 %v1058, %v1058
          %v1091 = vpack.c.bf16 %v1059, %v1059
          %v1092 = vpack.c.bf16 %v1060, %v1060
          %v1093 = vpack.c.bf16 %v1061, %v1061
          %v1094 = vpack.c.bf16 %v1062, %v1062
          %v1095 = vpack.c.bf16 %v1063, %v1063
          %v1096 = vpack.c.bf16 %v1064, %v1064
          %v1097 = vpack.c.bf16 %v1065, %v1065
          %v1098 = vpack.c.bf16 %v1066, %v1066
          %v1099 = vpack.c.bf16 %v1067, %v1067
          %v1100 = vpack.c.bf16 %v1068, %v1068
          %v1101 = vpack.c.bf16 %v1069, %v1069
          %v1102 = vpack.c.bf16 %v1070, %v1070
          %v1103 = vpack.c.bf16 %v1071, %v1071
          %v1104 = vpack.c.bf16 %v1072, %v1072
          %v1105 = vpack.c.bf16 %v1073, %v1073
          %v1106 = vpack.c.bf16 %v1074, %v1074
          %v1107 = vpack.c.bf16 %v1075, %v1075
          %v1108 = vpack.c.bf16 %v1076, %v1076
          %v1109 = vpack.c.bf16 %v1077, %v1077
          %v1110 = vpack.c.bf16 %v1078, %v1078
          %v1111 = vpack.c.bf16 %v1079, %v1079
          %v1112 = vpack.c.bf16 %v1080, %v1080
          %v1113 = vpack.c.bf16 %v1081, %v1081
          %v1114 = vpack.c.bf16 %v1082, %v1082
          %v1115 = vpack.c.bf16 %v1083, %v1083
          %v1116 = vpack.c.bf16 %v1084, %v1084
          %v1117 = vpack.c.bf16 %v1085, %v1085
          %v1118 = vpack.c.bf16 %v1086, %v1086
          %v1119 = vpack.c.bf16 %v1087, %v1087
          %v1120 = vpack.c.bf16 %v1088, %v1088
          %1121 = vst [vmem:[%s308] sm:$0xf] %v1089
          %1122 = vst [vmem:[%s308 + $0x4] sm:$0xf] %v1090
          %1123 = vst [vmem:[%s308 + $0x8] sm:$0xf] %v1091
          %1124 = vst [vmem:[%s308 + $0xc] sm:$0xf] %v1092
          %1125 = vst [vmem:[%s308 + $0x10] sm:$0xf] %v1093
          %1126 = vst [vmem:[%s308 + $0x14] sm:$0xf] %v1094
          %1127 = vst [vmem:[%s308 + $0x18] sm:$0xf] %v1095
          %1128 = vst [vmem:[%s308 + $0x1c] sm:$0xf] %v1096
          %1129 = vst [vmem:[%s308 + $0x20] sm:$0xf] %v1097
          %1130 = vst [vmem:[%s308 + $0x24] sm:$0xf] %v1098
          %1131 = vst [vmem:[%s308 + $0x28] sm:$0xf] %v1099
          %1132 = vst [vmem:[%s308 + $0x2c] sm:$0xf] %v1100
          %1133 = vst [vmem:[%s308 + $0x30] sm:$0xf] %v1101
          %1134 = vst [vmem:[%s308 + $0x34] sm:$0xf] %v1102
          %1135 = vst [vmem:[%s308 + $0x38] sm:$0xf] %v1103
          %1136 = vst [vmem:[%s308 + $0x3c] sm:$0xf] %v1104
          %1137 = vst [vmem:[%s308 + $0x40] sm:$0xf] %v1105
          %1138 = vst [vmem:[%s308 + $0x44] sm:$0xf] %v1106
          %1139 = vst [vmem:[%s308 + $0x48] sm:$0xf] %v1107
          %1140 = vst [vmem:[%s308 + $0x4c] sm:$0xf] %v1108
          %1141 = vst [vmem:[%s308 + $0x50] sm:$0xf] %v1109
          %1142 = vst [vmem:[%s308 + $0x54] sm:$0xf] %v1110
          %1143 = vst [vmem:[%s308 + $0x58] sm:$0xf] %v1111
          %1144 = vst [vmem:[%s308 + $0x5c] sm:$0xf] %v1112
          %1145 = vst [vmem:[%s308 + $0x60] sm:$0xf] %v1113
          %1146 = vst [vmem:[%s308 + $0x64] sm:$0xf] %v1114
          %1147 = vst [vmem:[%s308 + $0x68] sm:$0xf] %v1115
          %1148 = vst [vmem:[%s308 + $0x6c] sm:$0xf] %v1116
          %1149 = vst [vmem:[%s308 + $0x70] sm:$0xf] %v1117
          %1150 = vst [vmem:[%s308 + $0x74] sm:$0xf] %v1118
          %1151 = vst [vmem:[%s308 + $0x78] sm:$0xf] %v1119
          %1152 = vst [vmem:[%s308 + $0x7c] sm:$0xf] %v1120
        $region52: #{tpu_custom_call.1} parent=35 // pred_fallthru
          _
        %s1153 = sand.u32 %s170, 1
        %s1154 = scalar_lea.sflag [#allocation5], %s1153
        %s1155 = sand.u32 %s170, 1
        %s1156 = smul.addr %s1155, 128
        %s1157 = scalar_lea.vmem [#allocation8], %s1156
        // Predicated region
        $region53: #{tpu_custom_call.1} parent=35 // pred_check
          %p1158 = pneg %p180
        $region54: #{tpu_custom_call.1} parent=35 // pred_check_branch
          %1160 = sbr.rel (%p1158) target = $region56
        $region55: #{tpu_custom_call.1} parent=35 // pred_region
          %s1161 = smul.u32 32, %s28
          %1163 = vsyncadd %s1154, 0
          %s1164 = sadd.s32 %s29, %s1161
          %s1165 = smul.addr %s1164, 4
          %s1166 = scalar_lea.hbm %s4, %s1165
          %s1167 = sshll.u32 %s1157, 4
          %s1168 = int_to_ptr.vmem [resolvable:$true] %s1167
          %s1169 = sshll.u32 %s1166, 4
          %s1170 = int_to_ptr.hbm [resolvable:$true] %s1169
          %1175 = dma.vmem_to_hbm [thread:$0]  %s1168, 2048, %s1170, %s1154, 64, 64, 4
        $region56: #{tpu_custom_call.1} parent=35 // pred_fallthru
          _
      $region36: #{tpu_custom_call.1} parent=5 // pred_fallthru
        _
      %p1176 = scmp.le.s32.totalorder 2, %s17
      // Predicated region
      $region57: #{tpu_custom_call.1} parent=5 // pred_check
        %p1177 = pneg %p1176
      $region58: #{tpu_custom_call.1} parent=5 // pred_check_branch
        %1179 = sbr.rel (%p1177) target = $region60
      $region59: #{tpu_custom_call.1} parent=5 // pred_region
        %s1180 = ssub.s32 %s17, 2
        // Predicated region
        $region61: #{tpu_custom_call.1} parent=59 // pred_check
          %p1181 = pneg %p186
        $region62: #{tpu_custom_call.1} parent=59 // pred_check_branch
          %1183 = sbr.rel (%p1181) target = $region64
        $region63: #{tpu_custom_call.1} parent=59 // pred_region
          %s1184 = sand.u32 %s171, 1
          %s1185 = scalar_lea.sflag [#allocation5], %s1184
          %s1186 = sand.u32 %s171, 1
          %s1187 = smul.addr %s1186, 128
          %s1188 = scalar_lea.vmem [#allocation8], %s1187
          %1190 = dma.done %s1185, 2048
        $region64: #{tpu_custom_call.1} parent=59 // pred_fallthru
          _
      $region60: #{tpu_custom_call.1} parent=5 // pred_fallthru
        _
    $region6: #{tpu_custom_call.1} parent=1 // loop_footer
      %s21 = sadd.s32 1, %s17
    $region7: #{tpu_custom_call.1} parent=1 // loop_footer_branch
      %16 = sbr.rel target = $region3
    $region8: #{tpu_custom_call.1} parent=1 // loop_exit
      _
    %1191 = vsyncpa [#allocation4], 1
    %s1192 = scalar_lea.sflag [#allocation4], 1
    %1193 = vsyncpa %s1192, 1
    %1194 = vsyncpa [#allocation7], 1
    %1195 = vsyncpa [#allocation5], 1
    %s1196 = scalar_lea.sflag [#allocation5], 1
    %1197 = vsyncpa %s1196, 1

</llo_original>
